<compile_context>
chip_gen: v7x
topology: tpu7x:2x2x1
jax: 0.10.0
libtpu: 0.0.40
codegen_flags: <defaults>
</compile_context>

<pallas_src>
import functools
import math

import jax
import jax.numpy as jnp
from jax import lax
from jax.experimental import pallas as pl
from jax.experimental.pallas import tpu as pltpu


def _grouped_sum_rolls(ss, n, trail):
    """Sum ss (rows, n*trail) over the normalize axis (stride `trail` in the
    flattened lane axis) and leave the result broadcast to every member of its
    group.  Binary decomposition of n -> O(log2 n) circular lane rolls (XLU
    slot; essentially free in this HBM-bound kernel).  Valid for ANY n because
    shifts wrap modulo the full group axis (which is exactly the block width)."""
    acc = None
    acc_count = 0
    current = ss          # partial sum over `cur_count` consecutive groups
    cur_count = 1
    remaining = n
    while True:
        if remaining & 1:
            if acc is None:
                acc, acc_count = current, cur_count
            else:
                acc = acc + pltpu.roll(current, shift=acc_count * trail, axis=1)
                acc_count += cur_count
        remaining >>= 1
        if remaining == 0:
            break
        current = current + pltpu.roll(current, shift=cur_count * trail, axis=1)
        cur_count *= 2
    return acc


def _rmsnorm_kernel_2d(n, trail, x_ref, g_ref, o_ref):
    # Lane-dense path.  x_ref: (bl, n*trail)  g_ref: (1, n*trail)  o_ref like x.
    x = x_ref[...].astype(jnp.float32)
    ss = _grouped_sum_rolls(x * x, n, trail)
    inv = lax.rsqrt(jnp.maximum(ss, 1e-24))        # == 1 / max(||x||_2, 1e-12)
    o_ref[...] = (x * inv * g_ref[...]).astype(o_ref.dtype)


def _rmsnorm_kernel_3d(x_ref, g_ref, o_ref):
    # Fallback path (trail already lane-dense, or group not a multiple of 128).
    # x_ref: (bl, n, trail)   g_ref: (1, n, 1)
    x = x_ref[...].astype(jnp.float32)
    ss = jnp.sum(x * x, axis=1, keepdims=True)     # (bl, 1, trail)
    inv = lax.rsqrt(jnp.maximum(ss, 1e-24))
    o_ref[...] = (x * inv * g_ref[...]).astype(o_ref.dtype)


def _tpu_tuning():
    """(per-step in+out HBM traffic target, scoped-VMEM limit), per generation.
    v7x (3.2 TB/s HBM) needs bigger steps to amortize the ~0.35us/step pipeline
    overhead; v5e (~820 GB/s) is near roofline with smaller steps but needs its
    16 MiB scoped default raised once blocks grow past ~1 MiB."""
    kind = ""
    try:
        kind = jax.devices()[0].device_kind.lower()
    except Exception:
        pass
    if "v7" in kind or "7x" in kind:
        return 8 << 20, 48 << 20          # 4 MiB in + 4 MiB out per step
    if "v6" in kind or "6e" in kind or "6 lite" in kind:
        return 6 << 20, 48 << 20
    if "v5" in kind or "5e" in kind or "5 lite" in kind:
        return 4 << 20, 40 << 20
    return 4 << 20, 32 << 20


def _pick_block_rows(lead, row_bytes, row_f32_bytes, sublane_mult,
                     traffic_target, vmem_limit):
    """Leading rows per grid step.
      * ~traffic_target bytes of HBM traffic per step (input + output),
      * keep >= 8 grid steps when there is enough work so each v7x TensorCore
        gets >= 4 pipelined steps (and v5e/v6e keep DMA/compute overlap),
      * bound the VMEM working set: 2x double-buffered in + out blocks plus
        ~5 full-block f32 temporaries must fit in ~70% of the scoped limit,
      * round to the dtype's packed sublane tile (legality: multiple of 8 or
        the full extent on the sublane axis of the 2D view)."""
    bl = max(1, (traffic_target // 2) // max(row_bytes, 1))
    if lead >= 64:
        bl = min(bl, max(1, lead // 8))
    elif lead >= 16:
        bl = min(bl, lead // 2)
    per_row = 4 * row_bytes + 5 * row_f32_bytes
    bl = min(bl, max(1, int(0.7 * vmem_limit) // max(per_row, 1)))
    bl = min(bl, lead)
    if bl != lead:
        mult = sublane_mult if bl >= sublane_mult else 8
        bl = (bl // mult) * mult
        if bl == 0:
            bl = lead if lead <= 8 else 8
    return int(bl)


@functools.partial(jax.jit, static_argnames=("normalize_dim",))
def rmsnorm(x, g, normalize_dim=2):
    """Pallas RMSNorm matching the PyTorch module (scale=True)."""
    orig_shape = x.shape
    nd = normalize_dim
    n = int(orig_shape[nd])
    lead = int(math.prod(orig_shape[:nd]))
    trail = int(math.prod(orig_shape[nd + 1:]))
    group = n * trail
    itemsize = jnp.dtype(x.dtype).itemsize

    traffic_target, vmem_limit = _tpu_tuning()
    sublane_mult = 8 * max(1, 4 // itemsize)     # 8 f32 / 16 bf16 / 32 int8-fp8

    # Fold sqrt(n) into g once in the wrapper (O(n) work).
    gf = g.astype(jnp.float32).reshape(n) * math.sqrt(n)

    numel = lead * group
    cost = pl.CostEstimate(flops=5 * numel, transcendentals=numel,
                           bytes_accessed=2 * numel * itemsize + n * 4)
    cparams = pltpu.CompilerParams(dimension_semantics=("parallel",),
                                   vmem_limit_bytes=vmem_limit)

    # Lane-dense 2D view (free, layout-preserving reshape) whenever the flat
    # group width is a multiple of 128; handles ANY n via the roll chain, so
    # small-head shapes like (B, H, N, 32) never hit the masked-store path.
    use_2d = (trail % 128 != 0) and (group % 128 == 0)
    row_bytes = group * itemsize
    row_f32_bytes = group * 4
    bl = _pick_block_rows(lead, row_bytes, row_f32_bytes, sublane_mult,
                          traffic_target, vmem_limit)

    if use_2d:
        x2 = x.reshape(lead, group)
        g2 = jnp.repeat(gf, trail).reshape(1, group)
        out = pl.pallas_call(
            functools.partial(_rmsnorm_kernel_2d, n, trail),
            out_shape=jax.ShapeDtypeStruct((lead, group), x.dtype),
            grid_spec=pltpu.PrefetchScalarGridSpec(
                num_scalar_prefetch=0,
                grid=(pl.cdiv(lead, bl),),
                in_specs=[
                    pl.BlockSpec((bl, group), lambda i: (i, 0)),
                    pl.BlockSpec((1, group), lambda i: (0, 0)),
                ],
                out_specs=pl.BlockSpec((bl, group), lambda i: (i, 0)),
            ),
            compiler_params=cparams,
            cost_estimate=cost,
        )(x2, g2)
    else:
        # TODO(synk): shapes with a tiny `lead` but a huge n*trail slab still run
        # with grid~1 and no pipelining; a two-pass chunked-group reduction over
        # a second grid axis would restore overlap and cap VMEM for those.
        x3 = x.reshape(lead, n, trail)
        g3 = gf.reshape(1, n, 1)
        out = pl.pallas_call(
            _rmsnorm_kernel_3d,
            out_shape=jax.ShapeDtypeStruct((lead, n, trail), x.dtype),
            grid_spec=pltpu.PrefetchScalarGridSpec(
                num_scalar_prefetch=0,
                grid=(pl.cdiv(lead, bl),),
                in_specs=[
                    pl.BlockSpec((bl, n, trail), lambda i: (i, 0, 0)),
                    pl.BlockSpec((1, n, 1), lambda i: (0, 0, 0)),
                ],
                out_specs=pl.BlockSpec((bl, n, trail), lambda i: (i, 0, 0)),
            ),
            compiler_params=cparams,
            cost_estimate=cost,
        )(x3, g3)

    return out.reshape(orig_shape)


def rmsnorm_reference(x, g, normalize_dim=2):
    """Pure-JAX reference mirroring the PyTorch forward."""
    n = x.shape[normalize_dim]
    norm = jnp.sqrt(jnp.sum(x * x, axis=normalize_dim, keepdims=True))
    y = x / jnp.maximum(norm, 1e-12)
    g_shape = [1] * x.ndim
    g_shape[normalize_dim] = n
    return y * g.reshape(g_shape) * (n ** 0.5)


if __name__ == "__main__":
    key = jax.random.PRNGKey(0)
    k1, k2, k3, k4, k5 = jax.random.split(key, 5)

    # Case 1: attention-style (B, H, N, D), head_dim 32 < 128, N=16 power of
    # two -> lane-dense 2D path, log2(N) rolls.
    x1 = jax.random.normal(k1, (2, 4, 16, 32), dtype=jnp.float32)
    g1 = jnp.ones((16,), dtype=jnp.float32)          # module init: torch.ones(dim)
    out1 = jax.block_until_ready(rmsnorm(x1, g1, normalize_dim=2))
    ref1 = rmsnorm_reference(x1, g1, normalize_dim=2)
    assert out1.shape == x1.shape and out1.dtype == x1.dtype
    assert jnp.allclose(out1, ref1, atol=1e-5, rtol=1e-5)

    # Case 2: trailing dim already a multiple of 128 -> lane-dense 3D path.
    x2 = jax.random.normal(k2, (2, 2, 8, 128), dtype=jnp.float32)
    g2 = jax.random.normal(k3, (8,), dtype=jnp.float32)
    out2 = jax.block_until_ready(rmsnorm(x2, g2, normalize_dim=2))
    ref2 = rmsnorm_reference(x2, g2, normalize_dim=2)
    assert out2.shape == x2.shape and out2.dtype == x2.dtype
    assert jnp.allclose(out2, ref2, atol=1e-5, rtol=1e-5)

    # Case 3: non-power-of-two normalize dim (N=12), D=32 -> still lane-dense
    # 2D path via the binary-decomposition roll chain (new in this version).
    x3 = jax.random.normal(k4, (2, 3, 12, 32), dtype=jnp.float32)
    g3 = jax.random.normal(k5, (12,), dtype=jnp.float32)
    out3 = jax.block_until_ready(rmsnorm(x3, g3, normalize_dim=2))
    ref3 = rmsnorm_reference(x3, g3, normalize_dim=2)
    assert jnp.allclose(out3, ref3, atol=1e-5, rtol=1e-5)

    # Case 4: bf16 activations (common ViT case); compute in f32, store bf16.
    x4 = jax.random.normal(k1, (2, 4, 16, 32), dtype=jnp.bfloat16)
    g4 = jnp.ones((16,), dtype=jnp.float32)
    out4 = jax.block_until_ready(rmsnorm(x4, g4, normalize_dim=2))
    ref4 = rmsnorm_reference(x4.astype(jnp.float32), g4, normalize_dim=2)
    assert out4.dtype == jnp.bfloat16
    assert jnp.allclose(out4.astype(jnp.float32), ref4, atol=5e-2, rtol=5e-2)

    print("KERNEL_OK")
</pallas_src>

<mosaic_0001>
module attributes {stable_mosaic.version = 11 : i64} {
  func.func @_rmsnorm_kernel_2d(%arg0: i32, %arg1: memref<8x512xf32, #tpu.memory_space<vmem>>, %arg2: memref<1x512xf32, #tpu.memory_space<vmem>>, %arg3: memref<8x512xf32, #tpu.memory_space<vmem>>) attributes {dimension_semantics = [#tpu.dimension_semantics<parallel>], iteration_bounds = array<i64: 1>, scalar_prefetch = 0 : i64, scratch_operands = 0 : i64, tpu.core_type = #tpu.core_type<tc>, window_params = [{transform_indices = @transform_0, window_bounds = array<i64: 8, 512>}, {pipeline_mode = #tpu.pipeline_mode<synchronous>, transform_indices = @transform_1, window_bounds = array<i64: 1, 512>}, {transform_indices = @transform_2, window_bounds = array<i64: 8, 512>}]} {
    %c0 = arith.constant 0 : index
    %c0_0 = arith.constant 0 : index
    %0 = vector.load %arg1[%c0, %c0_0] : memref<8x512xf32, #tpu.memory_space<vmem>>, vector<8x512xf32>
    %1 = arith.mulf %0, %0 : vector<8x512xf32>
    %c32_i32 = arith.constant 32 : i32
    %2 = tpu.dynamic_rotate %1 by %c32_i32 dim 1 : vector<8x512xf32>, i32 -> vector<8x512xf32>
    %3 = arith.addf %1, %2 : vector<8x512xf32>
    %c64_i32 = arith.constant 64 : i32
    %4 = tpu.dynamic_rotate %3 by %c64_i32 dim 1 : vector<8x512xf32>, i32 -> vector<8x512xf32>
    %5 = arith.addf %3, %4 : vector<8x512xf32>
    %c128_i32 = arith.constant 128 : i32
    %6 = tpu.dynamic_rotate %5 by %c128_i32 dim 1 : vector<8x512xf32>, i32 -> vector<8x512xf32>
    %7 = arith.addf %5, %6 : vector<8x512xf32>
    %c256_i32 = arith.constant 256 : i32
    %8 = tpu.dynamic_rotate %7 by %c256_i32 dim 1 : vector<8x512xf32>, i32 -> vector<8x512xf32>
    %9 = arith.addf %7, %8 : vector<8x512xf32>
    %cst = arith.constant 1.000000e-24 : f32
    %10 = vector.broadcast %cst : f32 to vector<8x512xf32>
    %11 = arith.maximumf %9, %10 : vector<8x512xf32>
    %12 = math.rsqrt %11 : vector<8x512xf32>
    %13 = arith.mulf %0, %12 : vector<8x512xf32>
    %c0_1 = arith.constant 0 : index
    %c0_2 = arith.constant 0 : index
    %14 = vector.load %arg2[%c0_1, %c0_2] : memref<1x512xf32, #tpu.memory_space<vmem>>, vector<1x512xf32>
    %15 = vector.broadcast %14 : vector<1x512xf32> to vector<8x512xf32>
    %16 = arith.mulf %13, %15 : vector<8x512xf32>
    %c0_3 = arith.constant 0 : index
    %c0_4 = arith.constant 0 : index
    %17 = vector.load %arg3[%c0_3, %c0_4] : memref<8x512xf32, #tpu.memory_space<vmem>>, vector<8x512xf32>
    tpu.vector_store %arg3[%c0_3, %c0_4], %16 {strides = array<i32>} : memref<8x512xf32, #tpu.memory_space<vmem>>, vector<8x512xf32>,
    return
  }
  func.func @transform_0(%arg0: i32) -> (i32, i32) {
    %c0_i32 = arith.constant 0 : i32
    %c0_i32_0 = arith.constant 0 : i32
    return %arg0, %c0_i32 : i32, i32
  }
  func.func @transform_1(%arg0: i32) -> (i32, i32) {
    %c0_i32 = arith.constant 0 : i32
    %c0_i32_0 = arith.constant 0 : i32
    %c0_i32_1 = arith.constant 0 : i32
    return %c0_i32, %c0_i32_0 : i32, i32
  }
  func.func @transform_2(%arg0: i32) -> (i32, i32) {
    %c0_i32 = arith.constant 0 : i32
    %c0_i32_0 = arith.constant 0 : i32
    return %arg0, %c0_i32 : i32, i32
  }
}

</mosaic_0001>

<llo_original>
// kernel: rmsnorm.1
$region0: #{rmsnorm.1}
  #allocation0 [shape = 'u32[]', space=smem, size = 0x4, offset = 0x4, fixed_abs, tag = 'smem constant byte address 0x4 - core index']
  #allocation1 [shape = 'u32[144,128]{1,0:T(1,128)}', space=vmem, size = 0x12000, scoped, tag = 'internal scratch']
  %s0 = inlined_call_operand.vmem [shape: f32[8,512], index: 0, kind: input, shape index: {}]
  %s1 = inlined_call_operand.vmem [shape: f32[1,512], index: 1, kind: input, shape index: {}]
  %s2 = inlined_call_operand.vmem [shape: f32[8,512], index: 2, kind: output, shape index: {}]
  %s3 = sld [smem:[#allocation0]]
  $region18: #{rmsnorm.1} parent=0
    _
  %s5 = ssub.s32 1, %s3
  %s6 = scalar_select 0, %s5, %s3
  // Predicated region
  $region2: #{rmsnorm.1} parent=0 // pred_check
    _
  $region3: #{rmsnorm.1} parent=0 // pred_check_branch
    %8 = sbr.rel (0) target = $region5
  $region4: #{rmsnorm.1} parent=0 // pred_region
    _
  $region5: #{rmsnorm.1} parent=0 // pred_fallthru
    _
  // Predicated region
  $region6: #{rmsnorm.1} parent=0 // pred_check
    _
  $region7: #{rmsnorm.1} parent=0 // pred_check_branch
    %10 = sbr.rel (0) target = $region9
  $region8: #{rmsnorm.1} parent=0 // pred_region
    _
  $region9: #{rmsnorm.1} parent=0 // pred_fallthru
    _
  %v11 = vld [vmem:[%s0] sm:$0xff]
  %v12 = vld [vmem:[%s0 + $0x8] sm:$0xff]
  %v13 = vld [vmem:[%s0 + $0x10] sm:$0xff]
  %v14 = vld [vmem:[%s0 + $0x18] sm:$0xff]
  %v15 = vmul.f32 %v11, %v11
  %v16 = vmul.f32 %v12, %v12
  %v17 = vmul.f32 %v13, %v13
  %v18 = vmul.f32 %v14, %v14
  %19 = vrot.lane.b32.xlu0 %v15, 32
  %v20 = vpop.permute.xlu0 %19
  %21 = vrot.lane.b32.xlu0 %v16, 32
  %v22 = vpop.permute.xlu0 %21
  %23 = vrot.lane.b32.xlu0 %v17, 32
  %v24 = vpop.permute.xlu0 %23
  %25 = vrot.lane.b32.xlu0 %v18, 32
  %v26 = vpop.permute.xlu0 %25
  %v27 = vlaneseq
  %v28 = vand.u32 %v27, 127
  %vm29 = vcmp.lt.s32.totalorder %v28, 32
  %v30 = vsel %vm29, %v24, %v26
  %v31 = vsel %vm29, %v22, %v24
  %v32 = vsel %vm29, %v20, %v22
  %v33 = vsel %vm29, %v26, %v20
  %v34 = vadd.f32 %v15, %v33
  %v35 = vadd.f32 %v16, %v32
  %v36 = vadd.f32 %v17, %v31
  %v37 = vadd.f32 %v18, %v30
  %38 = vrot.lane.b32.xlu0 %v34, 64
  %v39 = vpop.permute.xlu0 %38
  %40 = vrot.lane.b32.xlu0 %v35, 64
  %v41 = vpop.permute.xlu0 %40
  %42 = vrot.lane.b32.xlu0 %v36, 64
  %v43 = vpop.permute.xlu0 %42
  %44 = vrot.lane.b32.xlu0 %v37, 64
  %v45 = vpop.permute.xlu0 %44
  %vm46 = vcmp.lt.s32.totalorder %v28, 64
  %v47 = vsel %vm46, %v43, %v45
  %v48 = vsel %vm46, %v41, %v43
  %v49 = vsel %vm46, %v39, %v41
  %v50 = vsel %vm46, %v45, %v39
  %v51 = vadd.f32 %v34, %v50
  %v52 = vadd.f32 %v35, %v49
  %v53 = vadd.f32 %v36, %v48
  %v54 = vadd.f32 %v37, %v47
  %v55 = vadd.f32 %v51, %v54
  %v56 = vadd.f32 %v52, %v51
  %v57 = vadd.f32 %v53, %v52
  %v58 = vadd.f32 %v54, %v53
  %v59 = vadd.f32 %v55, %v57
  %v60 = vadd.f32 %v56, %v58
  %v61 = vmax.f32 %v59, 1e-24
  %v62 = vmax.f32 %v60, 1e-24
  %v63 = vrsqrt.pop %v61
  %v64 = vrsqrt.pop %v62
  %v65 = vmul.f32 %v11, %v63
  %v66 = vmul.f32 %v12, %v64
  %v67 = vmul.f32 %v13, %v63
  %v68 = vmul.f32 %v14, %v64
  %v69 = vld [vmem:[%s1] sm:$0xf]
  %v71 = vlaneseq
  %v72 = vshrl.u32 %v71, 7
  %v73 = vsub.s32 0, %v72
  %v74 = vrot.slane %v69, %v73
  %v75 = vlaneseq
  %v76 = vshrl.u32 %v75, 7
  %v77 = vsub.s32 1, %v76
  %v78 = vrot.slane %v69, %v77
  %v79 = vlaneseq
  %v80 = vshrl.u32 %v79, 7
  %v81 = vsub.s32 2, %v80
  %v82 = vrot.slane %v69, %v81
  %v83 = vlaneseq
  %v84 = vshrl.u32 %v83, 7
  %v85 = vsub.s32 3, %v84
  %v86 = vrot.slane %v69, %v85
  %v91 = vmul.f32 %v65, %v74
  %v92 = vmul.f32 %v66, %v78
  %v93 = vmul.f32 %v67, %v82
  %v94 = vmul.f32 %v68, %v86
  %95 = vst [vmem:[%s2] sm:$0xff] %v91
  %96 = vst [vmem:[%s2 + $0x8] sm:$0xff] %v92
  %97 = vst [vmem:[%s2 + $0x10] sm:$0xff] %v93
  %98 = vst [vmem:[%s2 + $0x18] sm:$0xff] %v94
  // Predicated region
  $region10: #{rmsnorm.1} parent=0 // pred_check
    _
  $region11: #{rmsnorm.1} parent=0 // pred_check_branch
    %100 = sbr.rel (0) target = $region13
  $region12: #{rmsnorm.1} parent=0 // pred_region
    _
  $region13: #{rmsnorm.1} parent=0 // pred_fallthru
    _
  // Predicated region
  $region14: #{rmsnorm.1} parent=0 // pred_check
    _
  $region15: #{rmsnorm.1} parent=0 // pred_check_branch
    %102 = sbr.rel (0) target = $region17
  $region16: #{rmsnorm.1} parent=0 // pred_region
    _
  $region17: #{rmsnorm.1} parent=0 // pred_fallthru
    _

</llo_original>
